<compile_context>
chip_gen: v5e
topology: v5e:2x2
jax: 0.10.0
libtpu: 0.0.40
codegen_flags: <defaults>
</compile_context>

<pallas_src>
import functools

import jax
import jax.numpy as jnp
from jax.experimental import pallas as pl
from jax.experimental.pallas import tpu as pltpu


def _kl_kernel(x_ref, t_ref, out_ref, *, T: float):
    # x_ref, t_ref: [TB, C] student / teacher logit tiles (VMEM).
    # out_ref:      [1, TB] lane-dense per-row KL terms, already scaled by T*T.
    inv_T = jnp.float32(1.0 / T)
    scale = jnp.float32(T * T)
    eps = jnp.float32(1e-7)

    x = x_ref[...].astype(jnp.float32) * inv_T
    t = t_ref[...].astype(jnp.float32) * inv_T

    # log_softmax(student / T) along the class (lane) axis.
    x_sh = x - jnp.max(x, axis=-1, keepdims=True)
    log_x_sum = jnp.log(jnp.sum(jnp.exp(x_sh), axis=-1, keepdims=True))    # [TB,1]
    log_student = x_sh - log_x_sum                                          # [TB,C]

    # softmax(teacher / T) + eps and its log, without per-element divides:
    #   p      = t_exp / t_sum + eps
    #   log(p) = log(t_exp + eps * t_sum) - log(t_sum)
    t_exp = jnp.exp(t - jnp.max(t, axis=-1, keepdims=True))                 # [TB,C]
    t_sum = jnp.sum(t_exp, axis=-1, keepdims=True)                          # [TB,1]
    inv_t_sum = 1.0 / t_sum        # per-row divide only (TB elems, not TB*C)
    p = t_exp * inv_t_sum + eps                                             # [TB,C]
    log_p = jnp.log(t_exp + eps * t_sum) - jnp.log(t_sum)                   # [TB,C]

    per_row = scale * jnp.sum(p * (log_p - log_student), axis=-1)           # [TB]
    out_ref[...] = per_row[None, :]                                         # (1, TB)


def _choose_tb(B: int, C: int) -> int:
    """Pick a batch-tile size.

    Targets ~2 MiB per (TB, C) f32 input block; with 2 inputs x 2 pipeline
    buffers that is ~8 MiB of streaming VMEM plus a few TB*C intermediates,
    comfortably inside the 32 MiB scoped-VMEM limit on v5e/v6e/v7x while large
    enough to amortize the ~0.35 us/step grid overhead.
    """
    target = (2 * 1024 * 1024) // (4 * max(C, 1))
    if B <= max(target, 8):
        return B  # single block covering the whole batch (block == full dim)
    # Tiled path: TB must be a multiple of 128 so the (1, TB) output block is
    # lane-dense and legal.
    tb = max(128, (target // 128) * 128)
    return min(tb, 1024)
    # TODO(synk): add class-axis (C) tiling with online log-sum-exp accumulation
    # for vocab-scale C (C*128*4*4 would otherwise exceed VMEM, worst on v7x).


def kl_loss_pallas(output_batch, teacher_outputs, T: float = 8.0, reduce: bool = True,
                   softmax_fn: bool = True, tb: int | None = None):
    """Pallas TPU implementation of KL_Loss_equivalent.forward (softmax_fn=True)."""
    assert softmax_fn, "only the softmax_fn=True branch is implemented in the kernel"
    B, C = output_batch.shape
    TB = _choose_tb(B, C) if tb is None else tb
    kernel = functools.partial(_kl_kernel, T=float(T))

    per_row = pl.pallas_call(
        kernel,
        out_shape=jax.ShapeDtypeStruct((1, B), jnp.float32),
        grid_spec=pl.GridSpec(
            grid=(pl.cdiv(B, TB),),
            in_specs=[
                pl.BlockSpec((TB, C), lambda i: (i, 0)),
                pl.BlockSpec((TB, C), lambda i: (i, 0)),
            ],
            out_specs=pl.BlockSpec((1, TB), lambda i: (0, i)),
        ),
        compiler_params=pltpu.CompilerParams(
            dimension_semantics=("parallel",),
            vmem_limit_bytes=32 * 1024 * 1024,
        ),
        cost_estimate=pl.CostEstimate(
            flops=10 * B * C,
            transcendentals=3 * B * C,
            bytes_accessed=2 * B * C * 4 + B * 4,
        ),
    )(output_batch, teacher_outputs)

    per_row = per_row[0]  # (B,), already scaled by T*T
    if reduce:
        return jnp.mean(per_row)  # sum-of-rows / B (no mean-of-means issue)
    return per_row


def kl_loss_reference(output_batch, teacher_outputs, T=8.0, reduce=True):
    """Pure-JAX reference matching the PyTorch module."""
    ls = jax.nn.log_softmax(output_batch / T, axis=1)
    p = jax.nn.softmax(teacher_outputs / T, axis=1) + 1e-7
    per_row = jnp.sum(p * (jnp.log(p) - ls), axis=1)
    if reduce:
        return T * T * jnp.mean(per_row)
    return T * T * per_row


if __name__ == "__main__":
    key = jax.random.PRNGKey(0)
    k1, k2, k3, k4 = jax.random.split(key, 4)

    # Small shapes (single-block path): batch=8, num_classes=32.
    B, C = 8, 32
    student = jax.random.normal(k1, (B, C), dtype=jnp.float32) * 3.0
    teacher = jax.random.normal(k2, (B, C), dtype=jnp.float32) * 3.0

    loss = jax.block_until_ready(kl_loss_pallas(student, teacher, T=8.0, reduce=True))
    ref = kl_loss_reference(student, teacher, T=8.0, reduce=True)
    assert jnp.allclose(loss, ref, rtol=1e-5, atol=1e-5), (loss, ref)

    rows = jax.block_until_ready(kl_loss_pallas(student, teacher, T=8.0, reduce=False))
    ref_rows = kl_loss_reference(student, teacher, T=8.0, reduce=False)
    assert jnp.allclose(rows, ref_rows, rtol=1e-5, atol=1e-5)

    # Slightly larger batch to exercise the tiled, pipelined, lane-dense path
    # (grid=(2,), TB=128, parallel grid axis).
    B2, C2 = 256, 32
    student2 = jax.random.normal(k3, (B2, C2), dtype=jnp.float32) * 3.0
    teacher2 = jax.random.normal(k4, (B2, C2), dtype=jnp.float32) * 3.0
    loss2 = jax.block_until_ready(
        kl_loss_pallas(student2, teacher2, T=8.0, reduce=True, tb=128))
    ref2 = kl_loss_reference(student2, teacher2, T=8.0, reduce=True)
    assert jnp.allclose(loss2, ref2, rtol=1e-5, atol=1e-5), (loss2, ref2)

    rows2 = jax.block_until_ready(
        kl_loss_pallas(student2, teacher2, T=8.0, reduce=False, tb=128))
    ref_rows2 = kl_loss_reference(student2, teacher2, T=8.0, reduce=False)
    assert jnp.allclose(rows2, ref_rows2, rtol=1e-5, atol=1e-5)

    print("KERNEL_OK")
</pallas_src>

<mosaic_0001>
module attributes {stable_mosaic.version = 11 : i64} {
  func.func @_kl_kernel(%arg0: i32, %arg1: memref<8x32xf32, #tpu.memory_space<vmem>>, %arg2: memref<8x32xf32, #tpu.memory_space<vmem>>, %arg3: memref<1x8xf32, #tpu.memory_space<vmem>>) attributes {dimension_semantics = [#tpu.dimension_semantics<parallel>], iteration_bounds = array<i64: 1>, scalar_prefetch = 0 : i64, scratch_operands = 0 : i64, tpu.core_type = #tpu.core_type<tc>, window_params = [{transform_indices = @transform_0, window_bounds = array<i64: 8, 32>}, {transform_indices = @transform_1, window_bounds = array<i64: 8, 32>}, {transform_indices = @transform_2, window_bounds = array<i64: 1, 8>}]} {
    %c0 = arith.constant 0 : index
    %c0_0 = arith.constant 0 : index
    %0 = vector.load %arg1[%c0, %c0_0] : memref<8x32xf32, #tpu.memory_space<vmem>>, vector<8x32xf32>
    %cst = arith.constant 1.250000e-01 : f32
    %1 = vector.broadcast %cst : f32 to vector<8x32xf32>
    %2 = arith.mulf %0, %1 : vector<8x32xf32>
    %c0_1 = arith.constant 0 : index
    %c0_2 = arith.constant 0 : index
    %3 = vector.load %arg2[%c0_1, %c0_2] : memref<8x32xf32, #tpu.memory_space<vmem>>, vector<8x32xf32>
    %cst_3 = arith.constant 1.250000e-01 : f32
    %4 = vector.broadcast %cst_3 : f32 to vector<8x32xf32>
    %5 = arith.mulf %3, %4 : vector<8x32xf32>
    %cst_4 = arith.constant dense<0xFF800000> : vector<8xf32>
    %6 = vector.multi_reduction <maximumf>, %2, %cst_4 [1] : vector<8x32xf32> to vector<8xf32>
    %7 = vector.shape_cast %6 : vector<8xf32> to vector<8x1xf32>
    %8 = vector.broadcast %7 : vector<8x1xf32> to vector<8x32xf32>
    %9 = arith.subf %2, %8 : vector<8x32xf32>
    %10 = math.exp %9 : vector<8x32xf32>
    %cst_5 = arith.constant dense<0.000000e+00> : vector<8xf32>
    %11 = vector.multi_reduction <add>, %10, %cst_5 [1] : vector<8x32xf32> to vector<8xf32>
    %12 = vector.shape_cast %11 : vector<8xf32> to vector<8x1xf32>
    %13 = math.log %12 : vector<8x1xf32>
    %14 = vector.broadcast %13 : vector<8x1xf32> to vector<8x32xf32>
    %15 = arith.subf %9, %14 : vector<8x32xf32>
    %cst_6 = arith.constant dense<0xFF800000> : vector<8xf32>
    %16 = vector.multi_reduction <maximumf>, %5, %cst_6 [1] : vector<8x32xf32> to vector<8xf32>
    %17 = vector.shape_cast %16 : vector<8xf32> to vector<8x1xf32>
    %18 = vector.broadcast %17 : vector<8x1xf32> to vector<8x32xf32>
    %19 = arith.subf %5, %18 : vector<8x32xf32>
    %20 = math.exp %19 : vector<8x32xf32>
    %cst_7 = arith.constant dense<0.000000e+00> : vector<8xf32>
    %21 = vector.multi_reduction <add>, %20, %cst_7 [1] : vector<8x32xf32> to vector<8xf32>
    %22 = vector.shape_cast %21 : vector<8xf32> to vector<8x1xf32>
    %cst_8 = arith.constant 1.000000e+00 : f32
    %23 = vector.broadcast %cst_8 : f32 to vector<8x1xf32>
    %24 = arith.divf %23, %22 : vector<8x1xf32>
    %25 = vector.broadcast %24 : vector<8x1xf32> to vector<8x32xf32>
    %26 = arith.mulf %20, %25 : vector<8x32xf32>
    %cst_9 = arith.constant 1.000000e-07 : f32
    %27 = vector.broadcast %cst_9 : f32 to vector<8x32xf32>
    %28 = arith.addf %26, %27 : vector<8x32xf32>
    %cst_10 = arith.constant 1.000000e-07 : f32
    %29 = vector.broadcast %cst_10 : f32 to vector<8x1xf32>
    %30 = arith.mulf %29, %22 : vector<8x1xf32>
    %31 = vector.broadcast %30 : vector<8x1xf32> to vector<8x32xf32>
    %32 = arith.addf %20, %31 : vector<8x32xf32>
    %33 = math.log %32 : vector<8x32xf32>
    %34 = math.log %22 : vector<8x1xf32>
    %35 = vector.broadcast %34 : vector<8x1xf32> to vector<8x32xf32>
    %36 = arith.subf %33, %35 : vector<8x32xf32>
    %37 = arith.subf %36, %15 : vector<8x32xf32>
    %38 = arith.mulf %28, %37 : vector<8x32xf32>
    %cst_11 = arith.constant dense<0.000000e+00> : vector<8xf32>
    %39 = vector.multi_reduction <add>, %38, %cst_11 [1] : vector<8x32xf32> to vector<8xf32>
    %cst_12 = arith.constant 6.400000e+01 : f32
    %40 = vector.broadcast %cst_12 : f32 to vector<8xf32>
    %41 = arith.mulf %40, %39 : vector<8xf32>
    %42 = vector.shape_cast %41 : vector<8xf32> to vector<1x8xf32>
    %c0_13 = arith.constant 0 : index
    %c0_14 = arith.constant 0 : index
    %43 = vector.load %arg3[%c0_13, %c0_14] : memref<1x8xf32, #tpu.memory_space<vmem>>, vector<1x8xf32>
    tpu.vector_store %arg3[%c0_13, %c0_14], %42 {strides = array<i32>} : memref<1x8xf32, #tpu.memory_space<vmem>>, vector<1x8xf32>,
    return
  }
  func.func @transform_0(%arg0: i32) -> (i32, i32) {
    %c0_i32 = arith.constant 0 : i32
    %c0_i32_0 = arith.constant 0 : i32
    return %arg0, %c0_i32 : i32, i32
  }
  func.func @transform_1(%arg0: i32) -> (i32, i32) {
    %c0_i32 = arith.constant 0 : i32
    %c0_i32_0 = arith.constant 0 : i32
    return %arg0, %c0_i32 : i32, i32
  }
  func.func @transform_2(%arg0: i32) -> (i32, i32) {
    %c0_i32 = arith.constant 0 : i32
    %c0_i32_0 = arith.constant 0 : i32
    return %c0_i32, %arg0 : i32, i32
  }
}

</mosaic_0001>

<llo_original>
// kernel: tpu_custom_call.1
$region0: #{tpu_custom_call.1}
  #allocation0 [shape = 'u32[]', space=smem, size = 0x4, offset = 0x4, fixed_abs, tag = 'smem constant byte address 0x4 - core index']
  #allocation1 [shape = 'u32[72,128]{1,0:T(1,128)}', space=vmem, size = 0x9000, scoped, tag = 'internal scratch']
  %s0 = inlined_call_operand.hbm [shape: f32[8,32], index: 0, kind: input, shape index: {}]
  %s1 = inlined_call_operand.hbm [shape: f32[8,32], index: 1, kind: input, shape index: {}]
  %s2 = inlined_call_operand.hbm [shape: f32[1,8], index: 2, kind: output, shape index: {}]
  %s3 = sld [smem:[#allocation0]]
  $region26: #{tpu_custom_call.1} parent=0
    _
  %s5 = ssub.s32 1, %s3
  %s6 = scalar_select 0, %s5, %s3
  $region1: #{tpu_custom_call.1} parent=0
    #allocation2 [shape = 'u8[4096]{0}', space=vmem, size = 0x1000, scoped, tag = 'input window, operand 0, single buffered']
    #allocation3 [shape = 's32[1]{0}', space=sflag, size = 0x4, scoped, tag = 'scoped memory for tpu_custom_call.1']
    #allocation4 [shape = 's32[1]{0}', space=sflag, size = 0x4, scoped, tag = 'scoped memory for tpu_custom_call.1']
    #allocation5 [shape = 'u8[4096]{0}', space=vmem, size = 0x1000, scoped, tag = 'input window, operand 1, single buffered']
    #allocation6 [shape = 's32[1]{0}', space=sflag, size = 0x4, scoped, tag = 'scoped memory for tpu_custom_call.1']
    #allocation7 [shape = 'u8[512]{0}', space=vmem, size = 0x400, scoped, tag = 'output window, operand 0, single buffered']
    %7 = vsyncpa [#allocation3], 0
    %8 = vsyncpa [#allocation6], 0
    %9 = vsyncpa [#allocation4], 0
    // Predicated region
    $region2: #{tpu_custom_call.1} parent=1 // pred_check
      _
    $region3: #{tpu_custom_call.1} parent=1 // pred_check_branch
      %11 = sbr.rel (0) target = $region5
    $region4: #{tpu_custom_call.1} parent=1 // pred_region
      %13 = vsyncadd [#allocation3], 0
      %s15 = sshll.u32 %s0, 4
      %s16 = int_to_ptr.hbm [resolvable:$true] %s15
      %s17 = sshll.u32 [#allocation2], 4
      %s18 = int_to_ptr.vmem [resolvable:$true] %s17
      %20 = dma.hbm_to_vmem [thread:$0]  %s16, 128, %s18, [#allocation3]
    $region5: #{tpu_custom_call.1} parent=1 // pred_fallthru
      _
    // Predicated region
    $region6: #{tpu_custom_call.1} parent=1 // pred_check
      _
    $region7: #{tpu_custom_call.1} parent=1 // pred_check_branch
      %22 = sbr.rel (0) target = $region9
    $region8: #{tpu_custom_call.1} parent=1 // pred_region
      %24 = vsyncadd [#allocation6], 0
      %s26 = sshll.u32 %s1, 4
      %s27 = int_to_ptr.hbm [resolvable:$true] %s26
      %s28 = sshll.u32 [#allocation5], 4
      %s29 = int_to_ptr.vmem [resolvable:$true] %s28
      %31 = dma.hbm_to_vmem [thread:$0]  %s27, 128, %s29, [#allocation6]
    $region9: #{tpu_custom_call.1} parent=1 // pred_fallthru
      _
    // Predicated region
    $region10: #{tpu_custom_call.1} parent=1 // pred_check
      _
    $region11: #{tpu_custom_call.1} parent=1 // pred_check_branch
      %33 = sbr.rel (0) target = $region13
    $region12: #{tpu_custom_call.1} parent=1 // pred_region
      %35 = dma.done [#allocation3], 128
    $region13: #{tpu_custom_call.1} parent=1 // pred_fallthru
      _
    // Predicated region
    $region14: #{tpu_custom_call.1} parent=1 // pred_check
      _
    $region15: #{tpu_custom_call.1} parent=1 // pred_check_branch
      %37 = sbr.rel (0) target = $region17
    $region16: #{tpu_custom_call.1} parent=1 // pred_region
      %39 = dma.done [#allocation6], 128
    $region17: #{tpu_custom_call.1} parent=1 // pred_fallthru
      _
    %v40 = vld [vmem:[#allocation2] sm:$0xff]
    %v41 = vmul.f32 %v40, 0.125
    %v42 = vld [vmem:[#allocation5] sm:$0xff]
    %v43 = vmul.f32 %v42, 0.125
    %vm44 = vcmask 261120
    %v45 = vsel %vm44, %v41, -inf
    %46 = vmax.xlane.f32.xlu0 %v45
    %v47 = vpop.xlane.xlu0 %46
    %v48 = vsub.f32 %v41, %v47
    %v49 = vmul.f32 %v48, 1.442695
    %v50 = vpow.pop %v49
    %v51 = vsel %vm44, %v50, 0.0
    %52 = vadd.xlane.f32.xlu0 %v51
    %v53 = vpop.xlane.xlu0 %52
    %v54 = vlog2.pop %v53
    %v55 = vmul.f32 %v54, 0.6931472
    %v56 = vsub.f32 %v48, %v55
    %v57 = vsel %vm44, %v43, -inf
    %58 = vmax.xlane.f32.xlu0 %v57
    %v59 = vpop.xlane.xlu0 %58
    %v60 = vsub.f32 %v43, %v59
    %v61 = vmul.f32 %v60, 1.442695
    %v62 = vpow.pop %v61
    %v63 = vsel %vm44, %v62, 0.0
    %64 = vadd.xlane.f32.xlu0 %v63
    %v65 = vpop.xlane.xlu0 %64
    %v66 = vrcp.pop %v65
    %v67 = vmul.f32 %v65, %v66
    %v68 = vsub.f32 1.0, %v67
    %v69 = vmul.f32 %v66, %v68
    %v70 = vadd.f32 %v66, %v69
    %vm71 = vweird.f32 %v65
    %vm72 = vweird.f32 %v66
    %vm73 = vmor %vm71, %vm72
    %v74 = vsel %vm73, %v66, %v70
    %v75 = vand.u32 2147483647, %v65
    %vm76 = vcmp.eq.f32.partialorder %v75, 8.507059e+37
    %v77 = vand.u32 %v65, 2147483648
    %v78 = vor.u32 1.1754944e-38, %v77
    %v79 = vsel %vm76, %v78, %v74
    %v80 = vmul.f32 1.0, %v79
    %v81 = vmul.f32 %v62, %v80
    %v82 = vadd.f32 %v81, 1e-07
    %v83 = vmul.f32 %v65, 1e-07
    %v84 = vadd.f32 %v62, %v83
    %v85 = vlog2.pop %v84
    %v86 = vmul.f32 %v85, 0.6931472
    %v87 = vlog2.pop %v65
    %v88 = vmul.f32 %v87, 0.6931472
    %v89 = vsub.f32 %v86, %v88
    %v90 = vsub.f32 %v89, %v56
    %v91 = vmul.f32 %v82, %v90
    %v92 = vsel %vm44, %v91, 0.0
    %93 = vadd.xlane.f32.xlu0 %v92
    %v94 = vpop.xlane.xlu0 %93
    %v95 = vmul.f32 %v94, 64.0
    %v97 = vlaneseq
    %v98 = vand.u32 %v97, 127
    %v99 = vperm.slane %v95, %v98
    %vm101 = vcmask 57344
    %102 = vst.msk [vmem:[#allocation7] sm:$0x1] %vm101, %v99
    // Predicated region
    $region18: #{tpu_custom_call.1} parent=1 // pred_check
      _
    $region19: #{tpu_custom_call.1} parent=1 // pred_check_branch
      %104 = sbr.rel (0) target = $region21
    $region20: #{tpu_custom_call.1} parent=1 // pred_region
      %106 = vsyncadd [#allocation4], 0
      %s108 = sshll.u32 [#allocation7], 4
      %s109 = int_to_ptr.vmem [resolvable:$true] %s108
      %s110 = sshll.u32 %s2, 4
      %s111 = int_to_ptr.hbm [resolvable:$true] %s110
      %113 = dma.vmem_to_hbm [thread:$0]  %s109, 16, %s111, [#allocation4]
    $region21: #{tpu_custom_call.1} parent=1 // pred_fallthru
      _
    // Predicated region
    $region22: #{tpu_custom_call.1} parent=1 // pred_check
      _
    $region23: #{tpu_custom_call.1} parent=1 // pred_check_branch
      %115 = sbr.rel (0) target = $region25
    $region24: #{tpu_custom_call.1} parent=1 // pred_region
      %117 = dma.done [#allocation4], 16
    $region25: #{tpu_custom_call.1} parent=1 // pred_fallthru
      _
    %118 = vsyncpa [#allocation3], 1
    %119 = vsyncpa [#allocation6], 1
    %120 = vsyncpa [#allocation4], 1

</llo_original>
